<compile_context>
chip_gen: v6e
topology: v6e:2x2x1
jax: 0.10.0
libtpu: 0.0.40
codegen_flags: <defaults>
</compile_context>

<pallas_src>
import functools
import math

import jax
import jax.numpy as jnp
from jax.experimental import pallas as pl
from jax.experimental.pallas import tpu as pltpu

EPS = 0.003

_MIN_SPLIT_ROWS = 128  # below this, a single exact-size tile beats 2 grid steps


def _round_up(x, m):
    return ((x + m - 1) // m) * m


def _choose_batch_tile(B, block_b):
    """Pick (tile_rows, n_steps) for the batch grid.

    Overhead-bound kernel -> as few steps as possible; but once the batch is
    big enough, keep an EVEN number of roughly balanced steps (>= 2) so the
    "parallel" batch axis can be split across v7x's two TensorCores.
    """
    if B < _MIN_SPLIT_ROWS:
        return B, 1                      # one exact tile, no masked rows
    b8 = _round_up(B, 8)
    if b8 <= 2 * block_b:
        n = 2
    else:
        n = pl.cdiv(b8, block_b)
        n += n % 2                       # even step count for megacore balance
    tb = _round_up(pl.cdiv(B, n), 8)
    return tb, pl.cdiv(B, tb)


def _dense(x_f32, w_ref, b_ref, *, relu):
    """y = x @ W + b with f32 accumulation; elementwise stays f32 (v5e-safe)."""
    y = jnp.dot(x_f32.astype(w_ref.dtype), w_ref[...],
                preferred_element_type=jnp.float32)
    y = y + b_ref[...].astype(jnp.float32)
    if relu:
        y = jnp.maximum(y, 0.0)
    return y


def _actor_kernel(x_ref,                       # (TB, state_dim)
                  w1_ref, b1_ref,              # (state_dim, 256), (1, 256)
                  w2_ref, b2_ref,              # (256, 128),       (1, 128)
                  w3_ref, b3_ref,              # (128, 64),        (1, 64)
                  w4_ref, b4_ref,              # (64, out_dim),    (1, out_dim)
                  o_ref,                       # (TB, out_dim)
                  *, a_bound):
    x = x_ref[...].astype(jnp.float32)
    h1 = _dense(x, w1_ref, b1_ref, relu=True)
    h2 = _dense(h1, w2_ref, b2_ref, relu=True)
    h3 = _dense(h2, w3_ref, b3_ref, relu=True)
    h4 = _dense(h3, w4_ref, b4_ref, relu=False)
    o_ref[...] = jnp.tanh(h4) * a_bound


def actor_forward(state, params, a_bound, *, block_b=1024,
                  param_dtype=jnp.bfloat16, pad_out_lanes=True):
    """state: (B, state_dim) f32. params: dict w1..w4, b1..b4 (W as (in, out)).

    Returns (B, action_dim) f32 actions = tanh(MLP(state)) * a_bound.
    param_dtype=jnp.bfloat16 (default) casts weights/biases and the per-layer
    matmul inputs for the MXU; accumulation and all elementwise math stay f32.
    Pass param_dtype=None for a pure-f32 (bit-tighter) path.
    pad_out_lanes=False writes the unpadded (B, action_dim) output directly
    (masked stores, far less HBM writeback) -- the large-batch / v5e option.
    """
    B, state_dim = state.shape
    action_dim = params["w4"].shape[1]

    x = state.astype(jnp.float32)                 # no batch padding (see header)
    tb, n_steps = _choose_batch_tile(B, block_b)

    # Output lanes: lane-dense (padded to 128, unmasked vst) or exact.
    out_dim = _round_up(action_dim, 128) if pad_out_lanes else action_dim
    w4, b4 = params["w4"], params["b4"]
    if out_dim != action_dim:
        w4 = jnp.pad(w4, ((0, 0), (0, out_dim - action_dim)))
        b4 = jnp.pad(b4, ((0, 0), (0, out_dim - action_dim)))

    weights = [params["w1"], params["b1"],
               params["w2"], params["b2"],
               params["w3"], params["b3"],
               w4, b4]
    if param_dtype is not None:
        weights = [w.astype(param_dtype) for w in weights]

    # x / out tiled over the batch; weights resident via constant index_map.
    x_spec = pl.BlockSpec((tb, state_dim), lambda i: (i, 0))
    out_spec = pl.BlockSpec((tb, out_dim), lambda i: (i, 0))
    w_specs = [pl.BlockSpec(w.shape, lambda i: (0, 0)) for w in weights]

    kernel = functools.partial(_actor_kernel, a_bound=float(a_bound))

    out = pl.pallas_call(
        kernel,
        out_shape=jax.ShapeDtypeStruct((B, out_dim), jnp.float32),
        grid=(n_steps,),
        in_specs=[x_spec] + w_specs,
        out_specs=out_spec,
        compiler_params=pltpu.CompilerParams(
            dimension_semantics=("parallel",),      # megacore split on v7x
            vmem_limit_bytes=32 * 1024 * 1024),     # plenty even at tb=1024
    )(x, *weights)

    if out_dim != action_dim:
        out = out[:, :action_dim]
    return out


def init_actor_params(key, state_dim, action_dim):
    """Init matching the PyTorch module's __init__ semantics.

    PyTorch: fcN.weight has shape (out, in); fanin_init uses size[0] (== out)
    as fanin, reproducing the quoted code exactly. We store weights transposed,
    (in, out), for x @ W in the kernel. Biases keep nn.Linear's default
    uniform(-1/sqrt(in), 1/sqrt(in)) init (the PyTorch module never overrides
    biases; only fc4's weight is clamped to +-EPS).
    """
    dims = [(state_dim, 256), (256, 128), (128, 64), (64, action_dim)]
    keys = jax.random.split(key, 8)
    params = {}
    for i, (d_in, d_out) in enumerate(dims, start=1):
        kw, kb = keys[2 * (i - 1)], keys[2 * (i - 1) + 1]
        if i < 4:
            v = 1.0 / math.sqrt(d_out)   # fanin_init with fanin = size()[0] == out
        else:
            v = EPS
        w = jax.random.uniform(kw, (d_in, d_out), jnp.float32, minval=-v, maxval=v)
        bb = 1.0 / math.sqrt(d_in)
        b = jax.random.uniform(kb, (1, d_out), jnp.float32, minval=-bb, maxval=bb)
        params[f"w{i}"] = w
        params[f"b{i}"] = b
    return params


def _reference(state, params, a_bound):
    h = state.astype(jnp.float32)
    for i in range(1, 4):
        h = jnp.maximum(h @ params[f"w{i}"] + params[f"b{i}"], 0.0)
    return jnp.tanh(h @ params["w4"] + params["b4"]) * a_bound


if __name__ == "__main__":
    state_dim = 16
    action_dim = 4
    a_bound = 2.0

    key = jax.random.PRNGKey(0)
    k_params, k_small, k_big = jax.random.split(key, 3)
    params = init_actor_params(k_params, state_dim, action_dim)

    # 1) Pure-f32 path, single exact tile: tight numerical check vs reference.
    state_small = jax.random.normal(k_small, (8, state_dim), dtype=jnp.float32)
    act_small = jax.block_until_ready(
        actor_forward(state_small, params, a_bound, param_dtype=None))
    ref_small = _reference(state_small, params, a_bound)
    assert act_small.shape == (8, action_dim)
    assert jnp.allclose(act_small, ref_small, atol=1e-4), "f32 small-batch mismatch"

    # 2) Default bf16-weight path: 2-step "parallel" batch grid with a partial
    #    boundary tile (no wrapper pad/slice on the batch), lane-dense output.
    state_big = jax.random.normal(k_big, (300, state_dim), dtype=jnp.float32)
    act_big = jax.block_until_ready(actor_forward(state_big, params, a_bound))
    ref_big = _reference(state_big, params, a_bound)
    assert act_big.shape == (300, action_dim)
    assert jnp.allclose(act_big, ref_big, atol=2e-2), "bf16 big-batch mismatch"

    # 3) Unpadded-output variant (masked stores, minimal writeback) -- the
    #    large-batch / v5e alternative from the review.
    act_np = jax.block_until_ready(
        actor_forward(state_big, params, a_bound, pad_out_lanes=False))
    assert act_np.shape == (300, action_dim)
    assert jnp.allclose(act_np, ref_big, atol=2e-2), "unpadded-output mismatch"

    print("KERNEL_OK")
</pallas_src>

<mosaic_0001>
module attributes {stable_mosaic.version = 11 : i64} {
  func.func @_actor_kernel(%arg0: i32, %arg1: memref<8x16xf32, #tpu.memory_space<vmem>>, %arg2: memref<16x256xf32, #tpu.memory_space<vmem>>, %arg3: memref<1x256xf32, #tpu.memory_space<vmem>>, %arg4: memref<256x128xf32, #tpu.memory_space<vmem>>, %arg5: memref<1x128xf32, #tpu.memory_space<vmem>>, %arg6: memref<128x64xf32, #tpu.memory_space<vmem>>, %arg7: memref<1x64xf32, #tpu.memory_space<vmem>>, %arg8: memref<64x128xf32, #tpu.memory_space<vmem>>, %arg9: memref<1x128xf32, #tpu.memory_space<vmem>>, %arg10: memref<8x128xf32, #tpu.memory_space<vmem>>) attributes {dimension_semantics = [#tpu.dimension_semantics<parallel>], iteration_bounds = array<i64: 1>, scalar_prefetch = 0 : i64, scratch_operands = 0 : i64, tpu.core_type = #tpu.core_type<tc>, window_params = [{transform_indices = @transform_0, window_bounds = array<i64: 8, 16>}, {pipeline_mode = #tpu.pipeline_mode<synchronous>, transform_indices = @transform_1, window_bounds = array<i64: 16, 256>}, {pipeline_mode = #tpu.pipeline_mode<synchronous>, transform_indices = @transform_2, window_bounds = array<i64: 1, 256>}, {pipeline_mode = #tpu.pipeline_mode<synchronous>, transform_indices = @transform_3, window_bounds = array<i64: 256, 128>}, {pipeline_mode = #tpu.pipeline_mode<synchronous>, transform_indices = @transform_4, window_bounds = array<i64: 1, 128>}, {pipeline_mode = #tpu.pipeline_mode<synchronous>, transform_indices = @transform_5, window_bounds = array<i64: 128, 64>}, {pipeline_mode = #tpu.pipeline_mode<synchronous>, transform_indices = @transform_6, window_bounds = array<i64: 1, 64>}, {pipeline_mode = #tpu.pipeline_mode<synchronous>, transform_indices = @transform_7, window_bounds = array<i64: 64, 128>}, {pipeline_mode = #tpu.pipeline_mode<synchronous>, transform_indices = @transform_8, window_bounds = array<i64: 1, 128>}, {transform_indices = @transform_9, window_bounds = array<i64: 8, 128>}]} {
    %c0 = arith.constant 0 : index
    %c0_0 = arith.constant 0 : index
    %0 = vector.load %arg1[%c0, %c0_0] : memref<8x16xf32, #tpu.memory_space<vmem>>, vector<8x16xf32>
    %c0_1 = arith.constant 0 : index
    %c0_2 = arith.constant 0 : index
    %1 = vector.load %arg2[%c0_1, %c0_2] : memref<16x256xf32, #tpu.memory_space<vmem>>, vector<16x256xf32>
    %cst = arith.constant dense<0.000000e+00> : vector<8x256xf32>
    %2 = tpu.matmul %0, %1, %cst {dimension_numbers = #tpu.dot_dimension_numbers<[1], [0], [0], [1], [0, 0, 1, 1], [], []>} : vector<8x16xf32>, vector<16x256xf32>, vector<8x256xf32> -> vector<8x256xf32>
    %c0_3 = arith.constant 0 : index
    %c0_4 = arith.constant 0 : index
    %3 = vector.load %arg3[%c0_3, %c0_4] : memref<1x256xf32, #tpu.memory_space<vmem>>, vector<1x256xf32>
    %4 = vector.broadcast %3 : vector<1x256xf32> to vector<8x256xf32>
    %5 = arith.addf %2, %4 : vector<8x256xf32>
    %cst_5 = arith.constant 0.000000e+00 : f32
    %6 = vector.broadcast %cst_5 : f32 to vector<8x256xf32>
    %7 = arith.maximumf %5, %6 : vector<8x256xf32>
    %c0_6 = arith.constant 0 : index
    %c0_7 = arith.constant 0 : index
    %8 = vector.load %arg4[%c0_6, %c0_7] : memref<256x128xf32, #tpu.memory_space<vmem>>, vector<256x128xf32>
    %cst_8 = arith.constant dense<0.000000e+00> : vector<8x128xf32>
    %9 = tpu.matmul %7, %8, %cst_8 {dimension_numbers = #tpu.dot_dimension_numbers<[1], [0], [0], [1], [0, 0, 1, 1], [], []>} : vector<8x256xf32>, vector<256x128xf32>, vector<8x128xf32> -> vector<8x128xf32>
    %c0_9 = arith.constant 0 : index
    %c0_10 = arith.constant 0 : index
    %10 = vector.load %arg5[%c0_9, %c0_10] : memref<1x128xf32, #tpu.memory_space<vmem>>, vector<1x128xf32>
    %11 = vector.broadcast %10 : vector<1x128xf32> to vector<8x128xf32>
    %12 = arith.addf %9, %11 : vector<8x128xf32>
    %cst_11 = arith.constant 0.000000e+00 : f32
    %13 = vector.broadcast %cst_11 : f32 to vector<8x128xf32>
    %14 = arith.maximumf %12, %13 : vector<8x128xf32>
    %c0_12 = arith.constant 0 : index
    %c0_13 = arith.constant 0 : index
    %15 = vector.load %arg6[%c0_12, %c0_13] : memref<128x64xf32, #tpu.memory_space<vmem>>, vector<128x64xf32>
    %cst_14 = arith.constant dense<0.000000e+00> : vector<8x64xf32>
    %16 = tpu.matmul %14, %15, %cst_14 {dimension_numbers = #tpu.dot_dimension_numbers<[1], [0], [0], [1], [0, 0, 1, 1], [], []>} : vector<8x128xf32>, vector<128x64xf32>, vector<8x64xf32> -> vector<8x64xf32>
    %c0_15 = arith.constant 0 : index
    %c0_16 = arith.constant 0 : index
    %17 = vector.load %arg7[%c0_15, %c0_16] : memref<1x64xf32, #tpu.memory_space<vmem>>, vector<1x64xf32>
    %18 = vector.broadcast %17 : vector<1x64xf32> to vector<8x64xf32>
    %19 = arith.addf %16, %18 : vector<8x64xf32>
    %cst_17 = arith.constant 0.000000e+00 : f32
    %20 = vector.broadcast %cst_17 : f32 to vector<8x64xf32>
    %21 = arith.maximumf %19, %20 : vector<8x64xf32>
    %c0_18 = arith.constant 0 : index
    %c0_19 = arith.constant 0 : index
    %22 = vector.load %arg8[%c0_18, %c0_19] : memref<64x128xf32, #tpu.memory_space<vmem>>, vector<64x128xf32>
    %cst_20 = arith.constant dense<0.000000e+00> : vector<8x128xf32>
    %23 = tpu.matmul %21, %22, %cst_20 {dimension_numbers = #tpu.dot_dimension_numbers<[1], [0], [0], [1], [0, 0, 1, 1], [], []>} : vector<8x64xf32>, vector<64x128xf32>, vector<8x128xf32> -> vector<8x128xf32>
    %c0_21 = arith.constant 0 : index
    %c0_22 = arith.constant 0 : index
    %24 = vector.load %arg9[%c0_21, %c0_22] : memref<1x128xf32, #tpu.memory_space<vmem>>, vector<1x128xf32>
    %25 = vector.broadcast %24 : vector<1x128xf32> to vector<8x128xf32>
    %26 = arith.addf %23, %25 : vector<8x128xf32>
    %27 = math.tanh %26 : vector<8x128xf32>
    %cst_23 = arith.constant 2.000000e+00 : f32
    %28 = vector.broadcast %cst_23 : f32 to vector<8x128xf32>
    %29 = arith.mulf %27, %28 : vector<8x128xf32>
    %c0_24 = arith.constant 0 : index
    %c0_25 = arith.constant 0 : index
    %30 = vector.load %arg10[%c0_24, %c0_25] : memref<8x128xf32, #tpu.memory_space<vmem>>, vector<8x128xf32>
    tpu.vector_store %arg10[%c0_24, %c0_25], %29 {strides = array<i32>} : memref<8x128xf32, #tpu.memory_space<vmem>>, vector<8x128xf32>,
    return
  }
  func.func @transform_0(%arg0: i32) -> (i32, i32) {
    %c0_i32 = arith.constant 0 : i32
    %c0_i32_0 = arith.constant 0 : i32
    return %arg0, %c0_i32 : i32, i32
  }
  func.func @transform_1(%arg0: i32) -> (i32, i32) {
    %c0_i32 = arith.constant 0 : i32
    %c0_i32_0 = arith.constant 0 : i32
    %c0_i32_1 = arith.constant 0 : i32
    return %c0_i32, %c0_i32_0 : i32, i32
  }
  func.func @transform_2(%arg0: i32) -> (i32, i32) {
    %c0_i32 = arith.constant 0 : i32
    %c0_i32_0 = arith.constant 0 : i32
    %c0_i32_1 = arith.constant 0 : i32
    return %c0_i32, %c0_i32_0 : i32, i32
  }
  func.func @transform_3(%arg0: i32) -> (i32, i32) {
    %c0_i32 = arith.constant 0 : i32
    %c0_i32_0 = arith.constant 0 : i32
    %c0_i32_1 = arith.constant 0 : i32
    return %c0_i32, %c0_i32_0 : i32, i32
  }
  func.func @transform_4(%arg0: i32) -> (i32, i32) {
    %c0_i32 = arith.constant 0 : i32
    %c0_i32_0 = arith.constant 0 : i32
    %c0_i32_1 = arith.constant 0 : i32
    return %c0_i32, %c0_i32_0 : i32, i32
  }
  func.func @transform_5(%arg0: i32) -> (i32, i32) {
    %c0_i32 = arith.constant 0 : i32
    %c0_i32_0 = arith.constant 0 : i32
    %c0_i32_1 = arith.constant 0 : i32
    return %c0_i32, %c0_i32_0 : i32, i32
  }
  func.func @transform_6(%arg0: i32) -> (i32, i32) {
    %c0_i32 = arith.constant 0 : i32
    %c0_i32_0 = arith.constant 0 : i32
    %c0_i32_1 = arith.constant 0 : i32
    return %c0_i32, %c0_i32_0 : i32, i32
  }
  func.func @transform_7(%arg0: i32) -> (i32, i32) {
    %c0_i32 = arith.constant 0 : i32
    %c0_i32_0 = arith.constant 0 : i32
    %c0_i32_1 = arith.constant 0 : i32
    return %c0_i32, %c0_i32_0 : i32, i32
  }
  func.func @transform_8(%arg0: i32) -> (i32, i32) {
    %c0_i32 = arith.constant 0 : i32
    %c0_i32_0 = arith.constant 0 : i32
    %c0_i32_1 = arith.constant 0 : i32
    return %c0_i32, %c0_i32_0 : i32, i32
  }
  func.func @transform_9(%arg0: i32) -> (i32, i32) {
    %c0_i32 = arith.constant 0 : i32
    %c0_i32_0 = arith.constant 0 : i32
    return %arg0, %c0_i32 : i32, i32
  }
}

</mosaic_0001>

<llo_original>
// kernel: tpu_custom_call.1
$region0: #{tpu_custom_call.1}
  #allocation0 [shape = 'u32[]', space=smem, size = 0x4, offset = 0x4, fixed_abs, tag = 'smem constant byte address 0x4 - core index']
  #allocation1 [shape = 'u32[144,128]{1,0:T(1,128)}', space=vmem, size = 0x12000, scoped, tag = 'internal scratch']
  %s0 = inlined_call_operand.vmem [shape: f32[8,16], index: 0, kind: input, shape index: {}]
  %s1 = inlined_call_operand.vmem [shape: f32[16,256], index: 1, kind: input, shape index: {}]
  %s2 = inlined_call_operand.vmem [shape: f32[1,256], index: 2, kind: input, shape index: {}]
  %s3 = inlined_call_operand.hbm [shape: f32[256,128], index: 3, kind: input, shape index: {}]
  %s4 = inlined_call_operand.vmem [shape: f32[1,128], index: 4, kind: input, shape index: {}]
  %s5 = inlined_call_operand.vmem [shape: f32[128,64], index: 5, kind: input, shape index: {}]
  %s6 = inlined_call_operand.vmem [shape: f32[1,64], index: 6, kind: input, shape index: {}]
  %s7 = inlined_call_operand.vmem [shape: f32[64,128], index: 7, kind: input, shape index: {}]
  %s8 = inlined_call_operand.vmem [shape: f32[1,128], index: 8, kind: input, shape index: {}]
  %s9 = inlined_call_operand.hbm [shape: f32[8,128], index: 9, kind: output, shape index: {}]
  %s10 = sld [smem:[#allocation0]]
  $region50: #{tpu_custom_call.1} parent=0
    _
  %s12 = ssub.s32 1, %s10
  %s13 = scalar_select 0, %s12, %s10
  $region1: #{tpu_custom_call.1} parent=0
    #allocation2 [shape = 'u8[131072]{0}', space=vmem, size = 0x20000, scoped, tag = 'input window, operand 3, single buffered']
    #allocation3 [shape = 's32[1]{0}', space=sflag, size = 0x4, scoped, tag = 'scoped memory for tpu_custom_call.1']
    #allocation4 [shape = 's32[1]{0}', space=sflag, size = 0x4, scoped, tag = 'scoped memory for tpu_custom_call.1']
    #allocation5 [shape = 'u8[4096]{0}', space=vmem, size = 0x1000, scoped, tag = 'output window, operand 0, single buffered']
    %14 = vsyncpa [#allocation3], 0
    %15 = vsyncpa [#allocation4], 0
    // Predicated region
    $region2: #{tpu_custom_call.1} parent=1 // pred_check
      _
    $region3: #{tpu_custom_call.1} parent=1 // pred_check_branch
      %17 = sbr.rel (0) target = $region5
    $region4: #{tpu_custom_call.1} parent=1 // pred_region
      _
    $region5: #{tpu_custom_call.1} parent=1 // pred_fallthru
      _
    // Predicated region
    $region6: #{tpu_custom_call.1} parent=1 // pred_check
      _
    $region7: #{tpu_custom_call.1} parent=1 // pred_check_branch
      %19 = sbr.rel (0) target = $region9
    $region8: #{tpu_custom_call.1} parent=1 // pred_region
      _
    $region9: #{tpu_custom_call.1} parent=1 // pred_fallthru
      _
    // Predicated region
    $region10: #{tpu_custom_call.1} parent=1 // pred_check
      _
    $region11: #{tpu_custom_call.1} parent=1 // pred_check_branch
      %21 = sbr.rel (0) target = $region13
    $region12: #{tpu_custom_call.1} parent=1 // pred_region
      _
    $region13: #{tpu_custom_call.1} parent=1 // pred_fallthru
      _
    // Predicated region
    $region14: #{tpu_custom_call.1} parent=1 // pred_check
      _
    $region15: #{tpu_custom_call.1} parent=1 // pred_check_branch
      %23 = sbr.rel (0) target = $region17
    $region16: #{tpu_custom_call.1} parent=1 // pred_region
      %s25 = ssub.s32 4096, 4096
      %26 = vsyncadd [#allocation3], %s25
      %s27 = sshll.u32 [#allocation2], 4
      %s28 = int_to_ptr.vmem [resolvable:$true] %s27
      %33 = dma.hbm_to_vmem [thread:$0]  %s3, 4096, %s28, [#allocation3], 128, 128, 8
    $region17: #{tpu_custom_call.1} parent=1 // pred_fallthru
      _
    // Predicated region
    $region18: #{tpu_custom_call.1} parent=1 // pred_check
      _
    $region19: #{tpu_custom_call.1} parent=1 // pred_check_branch
      %35 = sbr.rel (0) target = $region21
    $region20: #{tpu_custom_call.1} parent=1 // pred_region
      _
    $region21: #{tpu_custom_call.1} parent=1 // pred_fallthru
      _
    // Predicated region
    $region22: #{tpu_custom_call.1} parent=1 // pred_check
      _
    $region23: #{tpu_custom_call.1} parent=1 // pred_check_branch
      %37 = sbr.rel (0) target = $region25
    $region24: #{tpu_custom_call.1} parent=1 // pred_region
      _
    $region25: #{tpu_custom_call.1} parent=1 // pred_fallthru
      _
    // Predicated region
    $region26: #{tpu_custom_call.1} parent=1 // pred_check
      _
    $region27: #{tpu_custom_call.1} parent=1 // pred_check_branch
      %39 = sbr.rel (0) target = $region29
    $region28: #{tpu_custom_call.1} parent=1 // pred_region
      _
    $region29: #{tpu_custom_call.1} parent=1 // pred_fallthru
      _
    // Predicated region
    $region30: #{tpu_custom_call.1} parent=1 // pred_check
      _
    $region31: #{tpu_custom_call.1} parent=1 // pred_check_branch
      %41 = sbr.rel (0) target = $region33
    $region32: #{tpu_custom_call.1} parent=1 // pred_region
      _
    $region33: #{tpu_custom_call.1} parent=1 // pred_fallthru
      _
    // Predicated region
    $region34: #{tpu_custom_call.1} parent=1 // pred_check
      _
    $region35: #{tpu_custom_call.1} parent=1 // pred_check_branch
      %43 = sbr.rel (0) target = $region37
    $region36: #{tpu_custom_call.1} parent=1 // pred_region
      _
    $region37: #{tpu_custom_call.1} parent=1 // pred_fallthru
      _
    // Predicated region
    $region38: #{tpu_custom_call.1} parent=1 // pred_check
      _
    $region39: #{tpu_custom_call.1} parent=1 // pred_check_branch
      %45 = sbr.rel (0) target = $region41
    $region40: #{tpu_custom_call.1} parent=1 // pred_region
      %46 = dma.done [#allocation3], 4096
    $region41: #{tpu_custom_call.1} parent=1 // pred_fallthru
      _
    %v47 = vld [vmem:[%s0] sm:$0xff]
    %v48 = vld [vmem:[%s1] sm:$0xff]
    %v49 = vld [vmem:[%s1 + $0x8] sm:$0xff]
    %v50 = vld [vmem:[%s1 + $0x10] sm:$0xff]
    %v51 = vld [vmem:[%s1 + $0x18] sm:$0xff]
    %v52 = vld [vmem:[%s2] sm:$0x3]
    %v54 = vlaneseq
    %v55 = vshrl.u32 %v54, 7
    %v56 = vsub.s32 0, %v55
    %v57 = vrot.slane %v52, %v56
    %v58 = vlaneseq
    %v59 = vshrl.u32 %v58, 7
    %v60 = vsub.s32 1, %v59
    %v61 = vrot.slane %v52, %v60
    %vm64 = vcmask 130048
    %v66 = vsel %vm64, %v47, 0
    %68 = vmatprep.subr.mxu0 0.0
    %69 = vmatpush1.msra.mxu0 0.0
    %70 = vmatprep.subr.mxu0 0.0
    %71 = vmatpush1.msra.mxu0 0.0
    %72 = vmatprep.subr.mxu0 0.0
    %73 = vmatpush1.msra.mxu0 0.0
    %74 = vmatprep.subr.mxu0 0.0
    %75 = vmatpush1.msra.mxu0 0.0
    %76 = vmatprep.subr.mxu0 0.0
    %77 = vmatpush1.msra.mxu0 0.0
    %78 = vmatprep.subr.mxu0 0.0
    %79 = vmatpush1.msra.mxu0 0.0
    %80 = vmatprep.subr.mxu0 0.0
    %81 = vmatpush1.msra.mxu0 0.0
    %82 = vmatprep.subr.mxu0 0.0
    %83 = vmatpush1.msra.mxu0 0.0
    %84 = vmatprep.subr.mxu0 0.0
    %85 = vmatpush1.msra.mxu0 0.0
    %86 = vmatprep.subr.mxu0 0.0
    %87 = vmatpush1.msra.mxu0 0.0
    %88 = vmatprep.subr.mxu0 0.0
    %89 = vmatpush1.msra.mxu0 0.0
    %90 = vmatprep.subr.mxu0 0.0
    %91 = vmatpush1.msra.mxu0 0.0
    %92 = vmatprep.subr.mxu0 0.0
    %93 = vmatpush1.msra.mxu0 0.0
    %94 = vmatprep.subr.mxu0 0.0
    %95 = vmatpush1.msra.mxu0 0.0
    %96 = vmatprep.subr.mxu0 %v51
    %97 = vmatpush1.msra.mxu0 %v50
    %98 = vmatprep.subr.mxu0 %v49
    %99 = vmatpush1.msra.mxu0 %v48
    %100 = vmatprep.subr.mxu0 0.0
    %101 = vmatpush2.msra.mxu0 0.0
    %102 = vmatprep.subr.mxu0 0.0
    %103 = vmatpush2.msra.mxu0 0.0
    %104 = vmatprep.subr.mxu0 0.0
    %105 = vmatpush2.msra.mxu0 0.0
    %106 = vmatprep.subr.mxu0 0.0
    %107 = vmatpush2.msra.mxu0 0.0
    %108 = vmatprep.subr.mxu0 0.0
    %109 = vmatpush2.msra.mxu0 0.0
    %110 = vmatprep.subr.mxu0 0.0
    %111 = vmatpush2.msra.mxu0 0.0
    %112 = vmatprep.subr.mxu0 0.0
    %113 = vmatpush2.msra.mxu0 0.0
    %114 = vmatprep.subr.mxu0 0.0
    %115 = vmatpush2.msra.mxu0 0.0
    %116 = vmatprep.subr.mxu0 0.0
    %117 = vmatpush2.msra.mxu0 0.0
    %118 = vmatprep.subr.mxu0 0.0
    %119 = vmatpush2.msra.mxu0 0.0
    %120 = vmatprep.subr.mxu0 0.0
    %121 = vmatpush2.msra.mxu0 0.0
    %122 = vmatprep.subr.mxu0 0.0
    %123 = vmatpush2.msra.mxu0 0.0
    %124 = vmatprep.subr.mxu0 0.0
    %125 = vmatpush2.msra.mxu0 0.0
    %126 = vmatprep.subr.mxu0 0.0
    %127 = vmatpush2.msra.mxu0 0.0
    %128 = vmatprep.subr.mxu0 0.0
    %129 = vmatpush2.msra.mxu0 0.0
    %130 = vmatprep.subr.mxu0 0.0
    %131 = vmatpush2.msra.mxu0 0.0
    %132 = vmatprep.mubr.f32.mxu0 0.0
    %133 = vmatmul.mubr.f32.gmra.mxu0 %v66
    %v134 = vpop.f32.mrf.mxu0
    %v135 = vadd.f32 %v57, %v134
    %v136 = vpop.f32.mrf.mxu0
    %v137 = vadd.f32 %v61, %v136
    %138 = vdwg.mxu0
    %v139 = vmax.f32 %v135, 0.0
    %v140 = vmax.f32 %v137, 0.0
    %v141 = vld [vmem:[#allocation2] sm:$0xff]
    %v142 = vld [vmem:[#allocation2 + $0x8] sm:$0xff]
    %v143 = vld [vmem:[#allocation2 + $0x10] sm:$0xff]
    %v144 = vld [vmem:[#allocation2 + $0x18] sm:$0xff]
    %v145 = vld [vmem:[#allocation2 + $0x20] sm:$0xff]
    %v146 = vld [vmem:[#allocation2 + $0x28] sm:$0xff]
    %v147 = vld [vmem:[#allocation2 + $0x30] sm:$0xff]
    %v148 = vld [vmem:[#allocation2 + $0x38] sm:$0xff]
    %v149 = vld [vmem:[#allocation2 + $0x40] sm:$0xff]
    %v150 = vld [vmem:[#allocation2 + $0x48] sm:$0xff]
    %v151 = vld [vmem:[#allocation2 + $0x50] sm:$0xff]
    %v152 = vld [vmem:[#allocation2 + $0x58] sm:$0xff]
    %v153 = vld [vmem:[#allocation2 + $0x60] sm:$0xff]
    %v154 = vld [vmem:[#allocation2 + $0x68] sm:$0xff]
    %v155 = vld [vmem:[#allocation2 + $0x70] sm:$0xff]
    %v156 = vld [vmem:[#allocation2 + $0x78] sm:$0xff]
    %v157 = vld [vmem:[#allocation2 + $0x80] sm:$0xff]
    %v158 = vld [vmem:[#allocation2 + $0x88] sm:$0xff]
    %v159 = vld [vmem:[#allocation2 + $0x90] sm:$0xff]
    %v160 = vld [vmem:[#allocation2 + $0x98] sm:$0xff]
    %v161 = vld [vmem:[#allocation2 + $0xa0] sm:$0xff]
    %v162 = vld [vmem:[#allocation2 + $0xa8] sm:$0xff]
    %v163 = vld [vmem:[#allocation2 + $0xb0] sm:$0xff]
    %v164 = vld [vmem:[#allocation2 + $0xb8] sm:$0xff]
    %v165 = vld [vmem:[#allocation2 + $0xc0] sm:$0xff]
    %v166 = vld [vmem:[#allocation2 + $0xc8] sm:$0xff]
    %v167 = vld [vmem:[#allocation2 + $0xd0] sm:$0xff]
    %v168 = vld [vmem:[#allocation2 + $0xd8] sm:$0xff]
    %v169 = vld [vmem:[#allocation2 + $0xe0] sm:$0xff]
    %v170 = vld [vmem:[#allocation2 + $0xe8] sm:$0xff]
    %v171 = vld [vmem:[#allocation2 + $0xf0] sm:$0xff]
    %v172 = vld [vmem:[#allocation2 + $0xf8] sm:$0xff]
    %v173 = vld [vmem:[%s4] sm:$0x1]
    %v175 = vlaneseq
    %v176 = vshrl.u32 %v175, 7
    %v177 = vsub.s32 0, %v176
    %v178 = vrot.slane %v173, %v177
    %180 = vmatprep.subr.mxu0 0.0
    %181 = vmatpush1.msra.mxu0 %v156
    %182 = vmatprep.subr.mxu0 0.0
    %183 = vmatpush1.msra.mxu0 %v155
    %184 = vmatprep.subr.mxu0 0.0
    %185 = vmatpush1.msra.mxu0 %v154
    %186 = vmatprep.subr.mxu0 0.0
    %187 = vmatpush1.msra.mxu0 %v153
    %188 = vmatprep.subr.mxu0 0.0
    %189 = vmatpush1.msra.mxu0 %v152
    %190 = vmatprep.subr.mxu0 0.0
    %191 = vmatpush1.msra.mxu0 %v151
    %192 = vmatprep.subr.mxu0 0.0
    %193 = vmatpush1.msra.mxu0 %v150
    %194 = vmatprep.subr.mxu0 0.0
    %195 = vmatpush1.msra.mxu0 %v149
    %196 = vmatprep.subr.mxu0 0.0
    %197 = vmatpush1.msra.mxu0 %v148
    %198 = vmatprep.subr.mxu0 0.0
    %199 = vmatpush1.msra.mxu0 %v147
    %200 = vmatprep.subr.mxu0 0.0
    %201 = vmatpush1.msra.mxu0 %v146
    %202 = vmatprep.subr.mxu0 0.0
    %203 = vmatpush1.msra.mxu0 %v145
    %204 = vmatprep.subr.mxu0 0.0
    %205 = vmatpush1.msra.mxu0 %v144
    %206 = vmatprep.subr.mxu0 0.0
    %207 = vmatpush1.msra.mxu0 %v143
    %208 = vmatprep.subr.mxu0 0.0
    %209 = vmatpush1.msra.mxu0 %v142
    %210 = vmatprep.subr.mxu0 0.0
    %211 = vmatpush1.msra.mxu0 %v141
    %212 = vmatprep.subr.mxu0 0.0
    %213 = vmatpush2.msra.mxu0 %v172
    %214 = vmatprep.subr.mxu0 0.0
    %215 = vmatpush2.msra.mxu0 %v171
    %216 = vmatprep.subr.mxu0 0.0
    %217 = vmatpush2.msra.mxu0 %v170
    %218 = vmatprep.subr.mxu0 0.0
    %219 = vmatpush2.msra.mxu0 %v169
    %220 = vmatprep.subr.mxu0 0.0
    %221 = vmatpush2.msra.mxu0 %v168
    %222 = vmatprep.subr.mxu0 0.0
    %223 = vmatpush2.msra.mxu0 %v167
    %224 = vmatprep.subr.mxu0 0.0
    %225 = vmatpush2.msra.mxu0 %v166
    %226 = vmatprep.subr.mxu0 0.0
    %227 = vmatpush2.msra.mxu0 %v165
    %228 = vmatprep.subr.mxu0 0.0
    %229 = vmatpush2.msra.mxu0 %v164
    %230 = vmatprep.subr.mxu0 0.0
    %231 = vmatpush2.msra.mxu0 %v163
    %232 = vmatprep.subr.mxu0 0.0
    %233 = vmatpush2.msra.mxu0 %v162
    %234 = vmatprep.subr.mxu0 0.0
    %235 = vmatpush2.msra.mxu0 %v161
    %236 = vmatprep.subr.mxu0 0.0
    %237 = vmatpush2.msra.mxu0 %v160
    %238 = vmatprep.subr.mxu0 0.0
    %239 = vmatpush2.msra.mxu0 %v159
    %240 = vmatprep.subr.mxu0 0.0
    %241 = vmatpush2.msra.mxu0 %v158
    %242 = vmatprep.subr.mxu0 0.0
    %243 = vmatpush2.msra.mxu0 %v157
    %244 = vmatprep.mubr.f32.mxu0 %v140
    %245 = vmatmul.mubr.f32.gmra.mxu0 %v139
    %v246 = vpop.f32.mrf.mxu0
    %v247 = vadd.f32 %v178, %v246
    %v248 = vpop.f32.mrf.mxu0
    %249 = vdwg.mxu0
    %v250 = vmax.f32 %v247, 0.0
    %v251 = vld [vmem:[%s5] sm:$0xff]
    %v252 = vld [vmem:[%s5 + $0x8] sm:$0xff]
    %v253 = vld [vmem:[%s5 + $0x10] sm:$0xff]
    %v254 = vld [vmem:[%s5 + $0x18] sm:$0xff]
    %v255 = vld [vmem:[%s5 + $0x20] sm:$0xff]
    %v256 = vld [vmem:[%s5 + $0x28] sm:$0xff]
    %v257 = vld [vmem:[%s5 + $0x30] sm:$0xff]
    %v258 = vld [vmem:[%s5 + $0x38] sm:$0xff]
    %v259 = vld [vmem:[%s5 + $0x40] sm:$0xff]
    %v260 = vld [vmem:[%s5 + $0x48] sm:$0xff]
    %v261 = vld [vmem:[%s5 + $0x50] sm:$0xff]
    %v262 = vld [vmem:[%s5 + $0x58] sm:$0xff]
    %v263 = vld [vmem:[%s5 + $0x60] sm:$0xff]
    %v264 = vld [vmem:[%s5 + $0x68] sm:$0xff]
    %v265 = vld [vmem:[%s5 + $0x70] sm:$0xff]
    %v266 = vld [vmem:[%s5 + $0x78] sm:$0xff]
    %v267 = vld [vmem:[%s6] sm:$0x1]
    %v269 = vlaneseq
    %v270 = vshrl.u32 %v269, 7
    %v271 = vsub.s32 0, %v270
    %v272 = vrot.slane %v267, %v271
    %274 = vmatprep.subr.mxu0 0.0
    %275 = vmatpush1.msra.mxu0 %v266
    %276 = vmatprep.subr.mxu0 0.0
    %277 = vmatpush1.msra.mxu0 %v265
    %278 = vmatprep.subr.mxu0 0.0
    %279 = vmatpush1.msra.mxu0 %v264
    %280 = vmatprep.subr.mxu0 0.0
    %281 = vmatpush1.msra.mxu0 %v263
    %282 = vmatprep.subr.mxu0 0.0
    %283 = vmatpush1.msra.mxu0 %v262
    %284 = vmatprep.subr.mxu0 0.0
    %285 = vmatpush1.msra.mxu0 %v261
    %286 = vmatprep.subr.mxu0 0.0
    %287 = vmatpush1.msra.mxu0 %v260
    %288 = vmatprep.subr.mxu0 0.0
    %289 = vmatpush1.msra.mxu0 %v259
    %290 = vmatprep.subr.mxu0 0.0
    %291 = vmatpush1.msra.mxu0 %v258
    %292 = vmatprep.subr.mxu0 0.0
    %293 = vmatpush1.msra.mxu0 %v257
    %294 = vmatprep.subr.mxu0 0.0
    %295 = vmatpush1.msra.mxu0 %v256
    %296 = vmatprep.subr.mxu0 0.0
    %297 = vmatpush1.msra.mxu0 %v255
    %298 = vmatprep.subr.mxu0 0.0
    %299 = vmatpush1.msra.mxu0 %v254
    %300 = vmatprep.subr.mxu0 0.0
    %301 = vmatpush1.msra.mxu0 %v253
    %302 = vmatprep.subr.mxu0 0.0
    %303 = vmatpush1.msra.mxu0 %v252
    %304 = vmatprep.subr.mxu0 0.0
    %305 = vmatpush1.msra.mxu0 %v251
    %306 = vmatprep.subr.mxu0 0.0
    %307 = vmatpush2.msra.mxu0 0.0
    %308 = vmatprep.subr.mxu0 0.0
    %309 = vmatpush2.msra.mxu0 0.0
    %310 = vmatprep.subr.mxu0 0.0
    %311 = vmatpush2.msra.mxu0 0.0
    %312 = vmatprep.subr.mxu0 0.0
    %313 = vmatpush2.msra.mxu0 0.0
    %314 = vmatprep.subr.mxu0 0.0
    %315 = vmatpush2.msra.mxu0 0.0
    %316 = vmatprep.subr.mxu0 0.0
    %317 = vmatpush2.msra.mxu0 0.0
    %318 = vmatprep.subr.mxu0 0.0
    %319 = vmatpush2.msra.mxu0 0.0
    %320 = vmatprep.subr.mxu0 0.0
    %321 = vmatpush2.msra.mxu0 0.0
    %322 = vmatprep.subr.mxu0 0.0
    %323 = vmatpush2.msra.mxu0 0.0
    %324 = vmatprep.subr.mxu0 0.0
    %325 = vmatpush2.msra.mxu0 0.0
    %326 = vmatprep.subr.mxu0 0.0
    %327 = vmatpush2.msra.mxu0 0.0
    %328 = vmatprep.subr.mxu0 0.0
    %329 = vmatpush2.msra.mxu0 0.0
    %330 = vmatprep.subr.mxu0 0.0
    %331 = vmatpush2.msra.mxu0 0.0
    %332 = vmatprep.subr.mxu0 0.0
    %333 = vmatpush2.msra.mxu0 0.0
    %334 = vmatprep.subr.mxu0 0.0
    %335 = vmatpush2.msra.mxu0 0.0
    %336 = vmatprep.subr.mxu0 0.0
    %337 = vmatpush2.msra.mxu0 0.0
    %338 = vmatprep.mubr.f32.mxu0 0.0
    %339 = vmatmul.mubr.f32.gmra.mxu0 %v250
    %v340 = vpop.f32.mrf.mxu0
    %v341 = vadd.f32 %v272, %v340
    %v342 = vpop.f32.mrf.mxu0
    %343 = vdwg.mxu0
    %v344 = vmax.f32 %v341, 0.0
    %v345 = vld [vmem:[%s7] sm:$0xff]
    %v346 = vld [vmem:[%s7 + $0x8] sm:$0xff]
    %v347 = vld [vmem:[%s7 + $0x10] sm:$0xff]
    %v348 = vld [vmem:[%s7 + $0x18] sm:$0xff]
    %v349 = vld [vmem:[%s7 + $0x20] sm:$0xff]
    %v350 = vld [vmem:[%s7 + $0x28] sm:$0xff]
    %v351 = vld [vmem:[%s7 + $0x30] sm:$0xff]
    %v352 = vld [vmem:[%s7 + $0x38] sm:$0xff]
    %v353 = vld [vmem:[%s8] sm:$0x1]
    %v355 = vlaneseq
    %v356 = vshrl.u32 %v355, 7
    %v357 = vsub.s32 0, %v356
    %v358 = vrot.slane %v353, %v357
    %vm360 = vcmask 523264
    %v362 = vsel %vm360, %v344, 0
    %364 = vmatprep.subr.mxu0 0.0
    %365 = vmatpush1.msra.mxu0 0.0
    %366 = vmatprep.subr.mxu0 0.0
    %367 = vmatpush1.msra.mxu0 0.0
    %368 = vmatprep.subr.mxu0 0.0
    %369 = vmatpush1.msra.mxu0 0.0
    %370 = vmatprep.subr.mxu0 0.0
    %371 = vmatpush1.msra.mxu0 0.0
    %372 = vmatprep.subr.mxu0 0.0
    %373 = vmatpush1.msra.mxu0 0.0
    %374 = vmatprep.subr.mxu0 0.0
    %375 = vmatpush1.msra.mxu0 0.0
    %376 = vmatprep.subr.mxu0 0.0
    %377 = vmatpush1.msra.mxu0 0.0
    %378 = vmatprep.subr.mxu0 0.0
    %379 = vmatpush1.msra.mxu0 0.0
    %380 = vmatprep.subr.mxu0 0.0
    %381 = vmatpush1.msra.mxu0 %v352
    %382 = vmatprep.subr.mxu0 0.0
    %383 = vmatpush1.msra.mxu0 %v351
    %384 = vmatprep.subr.mxu0 0.0
    %385 = vmatpush1.msra.mxu0 %v350
    %386 = vmatprep.subr.mxu0 0.0
    %387 = vmatpush1.msra.mxu0 %v349
    %388 = vmatprep.subr.mxu0 0.0
    %389 = vmatpush1.msra.mxu0 %v348
    %390 = vmatprep.subr.mxu0 0.0
    %391 = vmatpush1.msra.mxu0 %v347
    %392 = vmatprep.subr.mxu0 0.0
    %393 = vmatpush1.msra.mxu0 %v346
    %394 = vmatprep.subr.mxu0 0.0
    %395 = vmatpush1.msra.mxu0 %v345
    %396 = vmatprep.subr.mxu0 0.0
    %397 = vmatpush2.msra.mxu0 0.0
    %398 = vmatprep.subr.mxu0 0.0
    %399 = vmatpush2.msra.mxu0 0.0
    %400 = vmatprep.subr.mxu0 0.0
    %401 = vmatpush2.msra.mxu0 0.0
    %402 = vmatprep.subr.mxu0 0.0
    %403 = vmatpush2.msra.mxu0 0.0
    %404 = vmatprep.subr.mxu0 0.0
    %405 = vmatpush2.msra.mxu0 0.0
    %406 = vmatprep.subr.mxu0 0.0
    %407 = vmatpush2.msra.mxu0 0.0
    %408 = vmatprep.subr.mxu0 0.0
    %409 = vmatpush2.msra.mxu0 0.0
    %410 = vmatprep.subr.mxu0 0.0
    %411 = vmatpush2.msra.mxu0 0.0
    %412 = vmatprep.subr.mxu0 0.0
    %413 = vmatpush2.msra.mxu0 0.0
    %414 = vmatprep.subr.mxu0 0.0
    %415 = vmatpush2.msra.mxu0 0.0
    %416 = vmatprep.subr.mxu0 0.0
    %417 = vmatpush2.msra.mxu0 0.0
    %418 = vmatprep.subr.mxu0 0.0
    %419 = vmatpush2.msra.mxu0 0.0
    %420 = vmatprep.subr.mxu0 0.0
    %421 = vmatpush2.msra.mxu0 0.0
    %422 = vmatprep.subr.mxu0 0.0
    %423 = vmatpush2.msra.mxu0 0.0
    %424 = vmatprep.subr.mxu0 0.0
    %425 = vmatpush2.msra.mxu0 0.0
    %426 = vmatprep.subr.mxu0 0.0
    %427 = vmatpush2.msra.mxu0 0.0
    %428 = vmatprep.mubr.f32.mxu0 0.0
    %429 = vmatmul.mubr.f32.gmra.mxu0 %v362
    %v430 = vpop.f32.mrf.mxu0
    %v431 = vadd.f32 %v358, %v430
    %v432 = vpop.f32.mrf.mxu0
    %433 = vdwg.mxu0
    %v434 = vtanh.pop %v431
    %v435 = vmul.f32 %v434, 2.0
    %436 = vst [vmem:[#allocation5] sm:$0xff] %v435
    // Predicated region
    $region42: #{tpu_custom_call.1} parent=1 // pred_check
      _
    $region43: #{tpu_custom_call.1} parent=1 // pred_check_branch
      %438 = sbr.rel (0) target = $region45
    $region44: #{tpu_custom_call.1} parent=1 // pred_region
      %s440 = ssub.s32 128, 128
      %441 = vsyncadd [#allocation4], %s440
      %s443 = sshll.u32 [#allocation5], 4
      %s444 = int_to_ptr.vmem [resolvable:$true] %s443
      %446 = dma.vmem_to_hbm [thread:$0]  %s444, 128, %s9, [#allocation4]
    $region45: #{tpu_custom_call.1} parent=1 // pred_fallthru
      _
    // Predicated region
    $region46: #{tpu_custom_call.1} parent=1 // pred_check
      _
    $region47: #{tpu_custom_call.1} parent=1 // pred_check_branch
      %448 = sbr.rel (0) target = $region49
    $region48: #{tpu_custom_call.1} parent=1 // pred_region
      %449 = dma.done [#allocation4], 128
    $region49: #{tpu_custom_call.1} parent=1 // pred_fallthru
      _
    %450 = vsyncpa [#allocation3], 1
    %451 = vsyncpa [#allocation4], 1

</llo_original>
